<compile_context>
chip_gen: v6e
topology: v6e:2x2x1
jax: 0.10.0
libtpu: 0.0.40
codegen_flags: <defaults>
</compile_context>

<pallas_src>
import jax
import jax.numpy as jnp
from jax.experimental import pallas as pl
from jax.experimental.pallas import tpu as pltpu

_LANE = 128
_MAX_TILE_ROWS = 4096              # 4096 * 128 * 4B = 2 MiB per f32 block
_VMEM_LIMIT = 32 * 1024 * 1024     # explicit scoped-VMEM limit (safe on v5e/v6e/v7x)


def _sublane(dtype):
    # f32 -> 8, bf16/f16 -> 16, int8/fp8 -> 32 (sub-32-bit dtypes pack along sublanes)
    itemsize = jnp.dtype(dtype).itemsize
    return max(8, 32 // max(1, itemsize))


def _make_row_sum_kernel(r_rows, tile_r):
    """Per-batch row sum, accumulated directly into the resident (1,128) output block."""
    ragged = (r_rows % tile_r) != 0

    def kernel(x_ref, sums_ref):
        ri = pl.program_id(1)

        @pl.when(ri == 0)
        def _init():
            sums_ref[...] = jnp.zeros_like(sums_ref)

        x = x_ref[...].astype(jnp.float32)          # (tile_r, 128)
        if ragged:
            # Final tile is partial: rows past r_rows hold unspecified data -> mask them.
            rows_valid = r_rows - ri * tile_r
            row_ids = jax.lax.broadcasted_iota(jnp.int32, x.shape, 0)
            x = jnp.where(row_ids < rows_valid, x, 0.0)
        sums_ref[...] += jnp.sum(x, axis=0, keepdims=True)   # XLU sublane-reduce + VPU acc

    return kernel


def _broadcast_kernel(vals_ref, o_ref):
    """Pure-store kernel: fill the (tile_r,128) output block with this batch's scalar."""
    v = vals_ref[pl.program_id(0)]                  # SMEM scalar read
    o_ref[...] = jnp.full(o_ref.shape, v, dtype=o_ref.dtype)


def pt_module_forward(x):
    orig_shape = x.shape
    b = orig_shape[0]
    n = 1
    for d in orig_shape[1:]:
        n *= d

    sublane = _sublane(x.dtype)
    r_rows = pl.cdiv(n, _LANE)
    n_pad = r_rows * _LANE

    # ---- lane-dense view (free reshape when n % 128 == 0) -------------------
    x2d = x.reshape(b, n)
    if n_pad != n:
        # Only hit when n is not a multiple of 128; zero pad is sum-neutral.
        x2d = jnp.pad(x2d, ((0, 0), (0, n_pad - n)))
    x3d = x2d.reshape(b, r_rows, _LANE)

    # Tile rows: sublane-aligned, decoupled from the row count (ragged edge is
    # masked in-kernel instead of rounding r_rows up to a tile_r multiple).
    if r_rows >= sublane:
        tile_r = min(_MAX_TILE_ROWS, (r_rows // sublane) * sublane)
    else:
        tile_r = r_rows                              # whole-dim block for tiny inputs
    num_r_tiles = pl.cdiv(r_rows, tile_r)

    itemsize = jnp.dtype(x.dtype).itemsize

    # ---- phase 1: per-batch reduction (read-once, f32 accumulate) ------------
    sums = pl.pallas_call(
        _make_row_sum_kernel(r_rows, tile_r),
        out_shape=jax.ShapeDtypeStruct((b, 1, _LANE), jnp.float32),
        grid=(b, num_r_tiles),
        in_specs=[pl.BlockSpec((None, tile_r, _LANE),
                               lambda bi, ri: (bi, ri, 0))],
        out_specs=pl.BlockSpec((None, 1, _LANE),
                               lambda bi, ri: (bi, 0, 0)),
        compiler_params=pltpu.CompilerParams(
            dimension_semantics=("parallel", "arbitrary"),
            vmem_limit_bytes=_VMEM_LIMIT),
        cost_estimate=pl.CostEstimate(
            flops=b * r_rows * _LANE,
            transcendentals=0,
            bytes_accessed=b * r_rows * _LANE * itemsize + b * _LANE * 4),
    )(x3d)

    # sum(2x + 5) == 2*sum(x) + 5*N  -> affine correction on the tiny (B,) sums.
    row_sums = jnp.sum(sums[:, 0, :], axis=-1)                 # (B,)
    vals = (2.0 * row_sums + 5.0 * jnp.float32(n)).astype(jnp.float32)

    # ---- phase 2: store-only broadcast write (scalar-prefetch values) --------
    out3d = pl.pallas_call(
        _broadcast_kernel,
        out_shape=jax.ShapeDtypeStruct((b, r_rows, _LANE), x.dtype),
        grid_spec=pltpu.PrefetchScalarGridSpec(
            num_scalar_prefetch=1,
            grid=(b, num_r_tiles),
            in_specs=[],
            out_specs=pl.BlockSpec((None, tile_r, _LANE),
                                   lambda bi, ri, vals_s: (bi, ri, 0))),
        compiler_params=pltpu.CompilerParams(
            dimension_semantics=("parallel", "parallel"),
            vmem_limit_bytes=_VMEM_LIMIT),
        cost_estimate=pl.CostEstimate(
            flops=0,
            transcendentals=0,
            bytes_accessed=b * r_rows * _LANE * itemsize),
    )(vals)

    out2d = out3d.reshape(b, n_pad)
    if n_pad != n:
        out2d = out2d[:, :n]
    return out2d.reshape(orig_shape)


if __name__ == "__main__":
    key = jax.random.PRNGKey(0)
    x = jax.random.normal(key, (2, 4, 16, 16), dtype=jnp.float32)

    out = pt_module_forward(x)
    jax.block_until_ready(out)

    # reference check (plain JAX)
    ref = x * 2.0 + 5.0
    ref = jnp.broadcast_to(
        jnp.sum(ref.reshape(x.shape[0], -1), axis=1).reshape(-1, 1, 1, 1),
        x.shape,
    )
    assert jnp.allclose(out, ref, rtol=1e-5, atol=1e-3), "mismatch vs reference"
    print("KERNEL_OK")
</pallas_src>

<mosaic_0001>
module attributes {stable_mosaic.version = 11 : i64} {
  func.func @kernel(%arg0: i32, %arg1: i32, %arg2: memref<1x8x128xf32, #tpu.memory_space<vmem>>, %arg3: memref<1x1x128xf32, #tpu.memory_space<vmem>>) attributes {dimension_semantics = [#tpu.dimension_semantics<parallel>, #tpu.dimension_semantics<arbitrary>], iteration_bounds = array<i64: 2, 1>, scalar_prefetch = 0 : i64, scratch_operands = 0 : i64, tpu.core_type = #tpu.core_type<tc>, window_params = [{transform_indices = @transform_0, window_bounds = array<i64: 1, 8, 128>}, {transform_indices = @transform_1, window_bounds = array<i64: 1, 1, 128>}]} {
    %c0_i32 = arith.constant 0 : i32
    %0 = arith.cmpi eq, %arg1, %c0_i32 : i32
    %1 = arith.extui %0 : i1 to i32
    %c0_i32_0 = arith.constant 0 : i32
    %2 = arith.cmpi ne, %1, %c0_i32_0 : i32
    scf.if %2 {
      %cst_9 = arith.constant 0.000000e+00 : f32
      %13 = vector.broadcast %cst_9 : f32 to vector<1x128xf32>
      %c0_10 = arith.constant 0 : index
      %c0_11 = arith.constant 0 : index
      %c0_12 = arith.constant 0 : index
      %14 = vector.load %arg3[%c0_10, %c0_11, %c0_12] : memref<1x1x128xf32, #tpu.memory_space<vmem>>, vector<1x1x128xf32>
      %15 = vector.shape_cast %14 : vector<1x1x128xf32> to vector<1x128xf32>
      %16 = vector.shape_cast %13 : vector<1x128xf32> to vector<1x1x128xf32>
      tpu.vector_store %arg3[%c0_10, %c0_11, %c0_12], %16 {strides = array<i32>} : memref<1x1x128xf32, #tpu.memory_space<vmem>>, vector<1x1x128xf32>,
    } else {
    }
    %c0 = arith.constant 0 : index
    %c0_1 = arith.constant 0 : index
    %c0_2 = arith.constant 0 : index
    %3 = vector.load %arg2[%c0, %c0_1, %c0_2] : memref<1x8x128xf32, #tpu.memory_space<vmem>>, vector<1x8x128xf32>
    %4 = vector.shape_cast %3 : vector<1x8x128xf32> to vector<8x128xf32>
    %c0_3 = arith.constant 0 : index
    %c0_4 = arith.constant 0 : index
    %c0_5 = arith.constant 0 : index
    %5 = vector.load %arg3[%c0_3, %c0_4, %c0_5] : memref<1x1x128xf32, #tpu.memory_space<vmem>>, vector<1x1x128xf32>
    %6 = vector.shape_cast %5 : vector<1x1x128xf32> to vector<1x128xf32>
    %cst = arith.constant dense<0.000000e+00> : vector<128xf32>
    %7 = vector.multi_reduction <add>, %4, %cst [0] : vector<8x128xf32> to vector<128xf32>
    %8 = vector.shape_cast %7 : vector<128xf32> to vector<1x128xf32>
    %9 = arith.addf %6, %8 : vector<1x128xf32>
    %c0_6 = arith.constant 0 : index
    %c0_7 = arith.constant 0 : index
    %c0_8 = arith.constant 0 : index
    %10 = vector.load %arg3[%c0_6, %c0_7, %c0_8] : memref<1x1x128xf32, #tpu.memory_space<vmem>>, vector<1x1x128xf32>
    %11 = vector.shape_cast %10 : vector<1x1x128xf32> to vector<1x128xf32>
    %12 = vector.shape_cast %9 : vector<1x128xf32> to vector<1x1x128xf32>
    tpu.vector_store %arg3[%c0_6, %c0_7, %c0_8], %12 {strides = array<i32>} : memref<1x1x128xf32, #tpu.memory_space<vmem>>, vector<1x1x128xf32>,
    return
  }
  func.func @transform_0(%arg0: i32, %arg1: i32) -> (i32, i32, i32) {
    %c0_i32 = arith.constant 0 : i32
    %c0_i32_0 = arith.constant 0 : i32
    return %arg0, %arg1, %c0_i32 : i32, i32, i32
  }
  func.func @transform_1(%arg0: i32, %arg1: i32) -> (i32, i32, i32) {
    %c0_i32 = arith.constant 0 : i32
    %c0_i32_0 = arith.constant 0 : i32
    %c0_i32_1 = arith.constant 0 : i32
    return %arg0, %c0_i32, %c0_i32_0 : i32, i32, i32
  }
}

</mosaic_0001>

<llo_original>
// kernel: tpu_custom_call.1
$region0: #{tpu_custom_call.1}
  #allocation0 [shape = 'u32[]', space=smem, size = 0x4, offset = 0x4, fixed_abs, tag = 'smem constant byte address 0x4 - core index']
  #allocation1 [shape = 'u32[144,128]{1,0:T(1,128)}', space=vmem, size = 0x12000, scoped, tag = 'internal scratch']
  %s0 = inlined_call_operand.hbm [shape: f32[2,8,128], index: 0, kind: input, shape index: {}]
  %s1 = inlined_call_operand.hbm [shape: f32[2,1,128], index: 1, kind: output, shape index: {}]
  %s2 = sld [smem:[#allocation0]]
  $region45: #{tpu_custom_call.1} parent=0
    _
  %s4 = ssub.s32 1, %s2
  %s5 = scalar_select 0, %s4, %s2
  $region1: #{tpu_custom_call.1} parent=0
    #allocation2 [shape = 'u8[8192]{0}', space=vmem, size = 0x2000, scoped, tag = 'input window, operand 0']
    #allocation3 [shape = 's32[2]{0}', space=sflag, size = 0x8, scoped, tag = 'scoped memory for tpu_custom_call.1']
    #allocation4 [shape = 's32[2]{0}', space=sflag, size = 0x8, scoped, tag = 'scoped memory for tpu_custom_call.1']
    #allocation5 [shape = 'u8[1024]{0}', space=vmem, size = 0x400, scoped, tag = 'output window, operand 0']
    %6 = vsyncpa [#allocation3], 0
    %s7 = scalar_lea.sflag [#allocation3], 1
    %8 = vsyncpa %s7, 0
    %9 = vsyncpa [#allocation4], 0
    %s10 = scalar_lea.sflag [#allocation4], 1
    %11 = vsyncpa %s10, 0
    loop: start=0, step=1, limit=4
    $region2: #{tpu_custom_call.1} parent=1 // loop_pre_header
      _
    $region3: #{tpu_custom_call.1} parent=1 // loop_header
      %s13 = sphi 0, %s17
      %p14 = scmp.ge.s32.totalorder %s13, 4
      %s20 = sphi 0, %s32
      %s21 = sphi 0, %s28
      %s22 = sphi 0, %s20
      %s23 = sphi 0, %s21
      %s24 = sphi 0, %s22
      %s25 = sphi 0, %s23
      %s37 = sphi 0, %s39
      %s40 = sphi 0, %s37
      %s41 = sphi 0, %s40
      %s57 = sphi 0, %s41
      %s63 = sphi 0, %s65
      %s66 = sphi 0, %s63
      %s67 = sphi 0, %s66
      %s83 = sphi 0, %s67
    $region4: #{tpu_custom_call.1} parent=1 // loop_header_branch
      %16 = sbr.rel (%p14) target = $region8
    $region5: #{tpu_custom_call.1} parent=1 // loop_body
      %s18 = ssub.s32 %s13, 1
      %s19 = ssub.s32 %s13, 2
      %s26 = sadd.s32 1, %s21
      %p27 = scmp.ge.s32.totalorder %s26, 1
      %s28 = scalar_select %p27, 0, %s26
      %s29 = sadd.s32 1, %s20
      %s30 = scalar_select %p27, %s29, %s20
      %p31 = scmp.ge.s32.totalorder %s30, 2
      %s32 = scalar_select %p31, 0, %s30
      %s33 = ssub.s32 %s20, %s32
      %s34 = ssub.s32 %s21, %s28
      %s35 = sor.u32 %s33, %s34
      %p36 = scmp.eq.s32.totalorder %s35, 0
      %s38 = sadd.s32 %s37, 1
      %s39 = scalar_select %p36, %s37, %s38
      %p42 = pneg %p36
      %p43 = scmp.eq.s32.totalorder %s13, 1
      %p44 = por %p42, %p43
      %p45 = scmp.ne.s32.totalorder %s37, %s40
      %p46 = scmp.eq.s32.totalorder %s13, 0
      %p47 = por %p45, %p46
      %p48 = scmp.ne.s32.totalorder %s37, %s40
      %p49 = scmp.eq.s32.totalorder %s18, 1
      %p50 = por %p48, %p49
      %p51 = scmp.ne.s32.totalorder %s40, %s41
      %p52 = scmp.eq.s32.totalorder %s18, 0
      %p53 = por %p51, %p52
      %p54 = scmp.ne.s32.totalorder %s40, %s41
      %p55 = scmp.eq.s32.totalorder %s19, 1
      %p56 = por %p54, %p55
      %p58 = scmp.ne.s32.totalorder %s41, %s57
      %p59 = scmp.eq.s32.totalorder %s19, 0
      %p60 = por %p58, %p59
      %s61 = ssub.s32 %s20, %s32
      %p62 = scmp.eq.s32.totalorder %s61, 0
      %s64 = sadd.s32 %s63, 1
      %s65 = scalar_select %p62, %s63, %s64
      %p68 = pneg %p62
      %p69 = scmp.eq.s32.totalorder %s13, 1
      %p70 = por %p68, %p69
      %p71 = scmp.ne.s32.totalorder %s63, %s66
      %p72 = scmp.eq.s32.totalorder %s13, 0
      %p73 = por %p71, %p72
      %p74 = scmp.ne.s32.totalorder %s63, %s66
      %p75 = scmp.eq.s32.totalorder %s18, 1
      %p76 = por %p74, %p75
      %p77 = scmp.ne.s32.totalorder %s66, %s67
      %p78 = scmp.eq.s32.totalorder %s18, 0
      %p79 = por %p77, %p78
      %p80 = scmp.ne.s32.totalorder %s66, %s67
      %p81 = scmp.eq.s32.totalorder %s19, 1
      %p82 = por %p80, %p81
      %p84 = scmp.ne.s32.totalorder %s67, %s83
      %p85 = scmp.eq.s32.totalorder %s19, 0
      %p86 = por %p84, %p85
      %p87 = scmp.le.s32.totalorder 1, %s13
      %p88 = scmp.lt.s32.totalorder %s13, 3
      %p89 = pnand %p87, %p88
      %p90 = pneg %p89
      // Predicated region
      $region9: #{tpu_custom_call.1} parent=5 // pred_check
        _
      $region10: #{tpu_custom_call.1} parent=5 // pred_check_branch
        %92 = sbr.rel (%p89) target = $region12
      $region11: #{tpu_custom_call.1} parent=5 // pred_region
        %s93 = ssub.s32 %s13, 1
      $region12: #{tpu_custom_call.1} parent=5 // pred_fallthru
        _
      %p94 = scmp.lt.s32.totalorder %s13, 2
      // Predicated region
      $region13: #{tpu_custom_call.1} parent=5 // pred_check
        %p95 = pneg %p94
      $region14: #{tpu_custom_call.1} parent=5 // pred_check_branch
        %97 = sbr.rel (%p95) target = $region16
      $region15: #{tpu_custom_call.1} parent=5 // pred_region
        // Predicated region
        $region17: #{tpu_custom_call.1} parent=15 // pred_check
          %p98 = pneg %p47
        $region18: #{tpu_custom_call.1} parent=15 // pred_check_branch
          %100 = sbr.rel (%p98) target = $region20
        $region19: #{tpu_custom_call.1} parent=15 // pred_region
          %s101 = sand.u32 %s37, 1
          %s102 = scalar_lea.sflag [#allocation3], %s101
          %s103 = sand.u32 %s37, 1
          %s104 = smul.addr %s103, 8
          %s105 = scalar_lea.vmem [#allocation2], %s104
          %s107 = ssub.s32 128, 128
          %108 = vsyncadd %s102, %s107
          %s109 = sadd.s32 %s21, %s20
          %s110 = smul.addr %s109, 128
          %s111 = scalar_lea.hbm %s0, %s110
          %s113 = sshll.u32 %s105, 4
          %s114 = int_to_ptr.vmem [resolvable:$true] %s113
          %116 = dma.hbm_to_vmem [thread:$0]  %s111, 128, %s114, %s102
        $region20: #{tpu_custom_call.1} parent=15 // pred_fallthru
          _
      $region16: #{tpu_custom_call.1} parent=5 // pred_fallthru
        _
      %p117 = scmp.le.s32.totalorder 1, %s13
      %p118 = scmp.lt.s32.totalorder %s13, 3
      %p119 = pnand %p117, %p118
      %p120 = pneg %p119
      // Predicated region
      $region21: #{tpu_custom_call.1} parent=5 // pred_check
        _
      $region22: #{tpu_custom_call.1} parent=5 // pred_check_branch
        %122 = sbr.rel (%p119) target = $region24
      $region23: #{tpu_custom_call.1} parent=5 // pred_region
        %s123 = ssub.s32 %s13, 1
        %s124 = sand.u32 %s40, 1
        %s125 = scalar_lea.sflag [#allocation3], %s124
        %s126 = sand.u32 %s40, 1
        %s127 = smul.addr %s126, 8
        %s128 = scalar_lea.vmem [#allocation2], %s127
        // Predicated region
        $region25: #{tpu_custom_call.1} parent=23 // pred_check
          %p129 = pneg %p53
        $region26: #{tpu_custom_call.1} parent=23 // pred_check_branch
          %131 = sbr.rel (%p129) target = $region28
        $region27: #{tpu_custom_call.1} parent=23 // pred_region
          %132 = dma.done %s125, 128
        $region28: #{tpu_custom_call.1} parent=23 // pred_fallthru
          _
        %s133 = sand.u32 %s40, 1
        %s134 = scalar_lea.sflag [#allocation3], %s133
        %s135 = sand.u32 %s40, 1
        %s136 = smul.addr %s135, 8
        %s137 = scalar_lea.vmem [#allocation2], %s136
        %p138 = pneg %p53
        %p139 = pneg %p50
        %p140 = pneg %p79
        %p141 = pneg %p76
        %s142 = sand.u32 %s66, 1
        %s143 = scalar_lea.sflag [#allocation4], %s142
        %s144 = sand.u32 %s66, 1
        %s145 = scalar_lea.vmem [#allocation5], %s144
        %p146 = scmp.eq.s32.totalorder %s23, 0
        // Predicated region
        $region29: #{tpu_custom_call.1} parent=23 // pred_check
          %p147 = pneg %p146
        $region30: #{tpu_custom_call.1} parent=23 // pred_check_branch
          %149 = sbr.rel (%p147) target = $region32
        $region31: #{tpu_custom_call.1} parent=23 // pred_region
          %150 = vst [vmem:[%s145] sm:$0x1] 0.0
        $region32: #{tpu_custom_call.1} parent=23 // pred_fallthru
          _
        %v151 = vld [vmem:[%s128] sm:$0xff]
        %v152 = vld [vmem:[%s145] sm:$0x1]
        %v153 = vrot.slane %v151, 4
        %v154 = vadd.f32 %v151, %v153
        %v155 = vrot.slane %v154, 2
        %v156 = vadd.f32 %v154, %v155
        %v157 = vrot.slane %v156, 1
        %v158 = vadd.f32 %v156, %v157
        %v159 = vadd.f32 %v152, %v158
        %160 = vst [vmem:[%s145] sm:$0x1] %v159
        %s161 = sand.u32 %s66, 1
        %s162 = scalar_lea.sflag [#allocation4], %s161
        %s163 = sand.u32 %s66, 1
        %s164 = scalar_lea.vmem [#allocation5], %s163
        // Predicated region
        $region33: #{tpu_custom_call.1} parent=23 // pred_check
          %p165 = pneg %p76
        $region34: #{tpu_custom_call.1} parent=23 // pred_check_branch
          %167 = sbr.rel (%p165) target = $region36
        $region35: #{tpu_custom_call.1} parent=23 // pred_region
          %s169 = ssub.s32 16, 16
          %170 = vsyncadd %s162, %s169
          %s171 = smul.addr %s22, 16
          %s172 = scalar_lea.hbm %s1, %s171
          %s174 = sshll.u32 %s164, 4
          %s175 = int_to_ptr.vmem [resolvable:$true] %s174
          %177 = dma.vmem_to_hbm [thread:$0]  %s175, 16, %s172, %s162
        $region36: #{tpu_custom_call.1} parent=23 // pred_fallthru
          _
      $region24: #{tpu_custom_call.1} parent=5 // pred_fallthru
        _
      %p178 = scmp.le.s32.totalorder 2, %s13
      // Predicated region
      $region37: #{tpu_custom_call.1} parent=5 // pred_check
        %p179 = pneg %p178
      $region38: #{tpu_custom_call.1} parent=5 // pred_check_branch
        %181 = sbr.rel (%p179) target = $region40
      $region39: #{tpu_custom_call.1} parent=5 // pred_region
        %s182 = ssub.s32 %s13, 2
        // Predicated region
        $region41: #{tpu_custom_call.1} parent=39 // pred_check
          %p183 = pneg %p82
        $region42: #{tpu_custom_call.1} parent=39 // pred_check_branch
          %185 = sbr.rel (%p183) target = $region44
        $region43: #{tpu_custom_call.1} parent=39 // pred_region
          %s186 = sand.u32 %s67, 1
          %s187 = scalar_lea.sflag [#allocation4], %s186
          %s188 = sand.u32 %s67, 1
          %s189 = scalar_lea.vmem [#allocation5], %s188
          %190 = dma.done %s187, 16
        $region44: #{tpu_custom_call.1} parent=39 // pred_fallthru
          _
      $region40: #{tpu_custom_call.1} parent=5 // pred_fallthru
        _
    $region6: #{tpu_custom_call.1} parent=1 // loop_footer
      %s17 = sadd.s32 1, %s13
    $region7: #{tpu_custom_call.1} parent=1 // loop_footer_branch
      %12 = sbr.rel target = $region3
    $region8: #{tpu_custom_call.1} parent=1 // loop_exit
      _
    %191 = vsyncpa [#allocation3], 1
    %s192 = scalar_lea.sflag [#allocation3], 1
    %193 = vsyncpa %s192, 1
    %194 = vsyncpa [#allocation4], 1
    %s195 = scalar_lea.sflag [#allocation4], 1
    %196 = vsyncpa %s195, 1

</llo_original>
